<compile_context>
chip_gen: v5e
topology: v5e:2x2
jax: 0.10.0
libtpu: 0.0.40
codegen_flags: <defaults>
</compile_context>

<pallas_src>
import functools

import jax
import jax.numpy as jnp
from jax.experimental import pallas as pl
from jax.experimental.pallas import tpu as pltpu


def _round_up(x, m):
    return ((x + m - 1) // m) * m


def cnn_event_kernel(x_ref, w_ref, b_ref, len_ref, o_ref, *, L, K, pad_l, D, KD_pad):
    """One grid step processes TB batch rows.

    x_ref:   (TB, L, D)      bf16  embeddings block
    w_ref:   (KD_pad, H_pad) bf16  im2col conv weight (zero-padded, resident)
    b_ref:   (1, H_pad)      f32   conv bias (zero-padded)
    len_ref: (TB, H_pad)     i32   valid lengths broadcast over lanes
    o_ref:   (TB, H_pad)     f32   pooled features (lane-dense store)
    """
    TB = x_ref.shape[0]
    H_pad = o_ref.shape[-1]

    x = x_ref[...]  # (TB, L, D) bf16

    # In-kernel im2col: tap k is x shifted by (k - pad_l) along time, zero at the
    # edges ('same' padding handled here, no HBM pre-pad pass in the wrapper).
    cols = []
    for k in range(K):  # static unroll over filter taps
        s = k - pad_l
        if s == 0:
            tap = x
        elif s < 0:
            tap = jnp.concatenate(
                [jnp.zeros((TB, -s, D), x.dtype), x[:, : L + s, :]], axis=1)
        else:
            tap = jnp.concatenate(
                [x[:, s:, :], jnp.zeros((TB, s, D), x.dtype)], axis=1)
        cols.append(tap)
    if KD_pad > K * D:  # pad contraction dim up to a multiple of 128
        cols.append(jnp.zeros((TB, L, KD_pad - K * D), x.dtype))
    xi = jnp.concatenate(cols, axis=-1).reshape(TB * L, KD_pad)  # (M, 128) bf16

    # Single MXU matmul, f32 accumulation.
    acc = jnp.dot(xi, w_ref[...], preferred_element_type=jnp.float32)
    acc = acc + b_ref[...].astype(jnp.float32)          # bias broadcast
    act = jnp.maximum(acc, 0.0).reshape(TB, L, H_pad)   # relu (opt.cnn_act)

    # Masked max-pool over time: only t < lengths[b] is valid.
    t_idx = jax.lax.broadcasted_iota(jnp.int32, (TB, L, H_pad), 1)
    lens = len_ref[...]                                  # (TB, H_pad) i32
    valid = t_idx < lens[:, None, :]
    masked = jnp.where(valid, act, -1e30)
    o_ref[...] = jnp.max(masked, axis=1).astype(o_ref.dtype)


def _choose_batch_block(B, L):
    """Pick TB (batch rows per grid step) and padded batch size.

    Targets ~256 MXU rows per step, TB a multiple of 8 (sublane tiling), capped
    at 64 to bound the f32 accumulator (TB*L x 128), and keeps >= 2 grid steps
    when possible so a parallel batch axis feeds both v7x TensorCores.
    """
    tb = _round_up(max(1, -(-256 // L)), 8)
    tb = max(8, min(64, tb))
    b_pad = _round_up(B, tb)
    if b_pad // tb < 2 and tb > 8:
        tb = tb // 2 if (tb // 2) % 8 == 0 else 8
        b_pad = _round_up(B, tb)
    return tb, b_pad


def cnn_event_detector(embeddings, positions, lengths, weight, bias, *, cnn_filter):
    """embeddings: (B, L, D) f32; positions, lengths: (B,) i32;
    weight: (H, D, K) (PyTorch Conv1d layout); bias: (H,). Returns (B, H) f32."""
    del positions  # only read by dynamic multi-pooling (disabled: multi_pooling=False)
    B, L, D = embeddings.shape
    H, _, K = weight.shape
    assert K == cnn_filter
    pad_l = (K - 1) // 2

    KD_pad = _round_up(K * D, 128)
    H_pad = _round_up(H, 128)
    TB, B_pad = _choose_batch_block(B, L)

    # im2col weight: row (k*D + c), col h = weight[h, c, k]; zero-pad to a
    # lane-dense (KD_pad, H_pad) tile; bf16 for the MXU.
    w_col = jnp.transpose(weight, (2, 1, 0)).reshape(K * D, H)
    w_col = jnp.pad(w_col, ((0, KD_pad - K * D), (0, H_pad - H))).astype(jnp.bfloat16)
    b_col = jnp.pad(bias, (0, H_pad - H)).reshape(1, H_pad).astype(jnp.float32)

    # bf16 x stream halves HBM traffic into the (memory-bound) kernel.
    x = embeddings.astype(jnp.bfloat16)
    lens = lengths.astype(jnp.int32)
    if B_pad > B:
        x = jnp.pad(x, ((0, B_pad - B), (0, 0), (0, 0)))
        lens = jnp.pad(lens, (0, B_pad - B))
    lens2d = jnp.broadcast_to(lens[:, None], (B_pad, H_pad))

    kernel = functools.partial(
        cnn_event_kernel, L=L, K=K, pad_l=pad_l, D=D, KD_pad=KD_pad)

    out = pl.pallas_call(
        kernel,
        out_shape=jax.ShapeDtypeStruct((B_pad, H_pad), jnp.float32),
        grid_spec=pltpu.PrefetchScalarGridSpec(
            num_scalar_prefetch=0,
            grid=(B_pad // TB,),
            in_specs=[
                pl.BlockSpec((TB, L, D), lambda b: (b, 0, 0)),        # x block
                pl.BlockSpec((KD_pad, H_pad), lambda b: (0, 0)),      # weight (resident)
                pl.BlockSpec((1, H_pad), lambda b: (0, 0)),           # bias (resident)
                pl.BlockSpec((TB, H_pad), lambda b: (b, 0)),          # lengths block
            ],
            out_specs=pl.BlockSpec((TB, H_pad), lambda b: (b, 0)),
        ),
        compiler_params=pltpu.CompilerParams(
            dimension_semantics=("parallel",),
            vmem_limit_bytes=32 * 1024 * 1024,   # safe on v5e/v6e/v7x budgets
        ),
    )(x, w_col, b_col, lens2d)
    return out[:B, :H]


def _reference(embeddings, lengths, weight, bias):
    # pure-JAX reference of conv1d('same') -> relu -> masked max-pool
    B, L, D = embeddings.shape
    H, _, K = weight.shape
    pad_l = (K - 1) // 2
    x_pad = jnp.pad(embeddings, ((0, 0), (pad_l, K - 1 - pad_l), (0, 0)))
    taps = jnp.stack([x_pad[:, k:k + L, :] for k in range(K)], axis=2)  # (B,L,K,D)
    conv = jnp.einsum("blkd,hdk->blh", taps, weight) + bias[None, None, :]
    act = jnp.maximum(conv, 0.0)
    t_idx = jnp.arange(L)[None, :, None]
    masked = jnp.where(t_idx < lengths[:, None, None], act, -1e30)
    return jnp.max(masked, axis=1)


if __name__ == "__main__":
    # Small shapes consistent with the module's forward signature.
    batch, max_len, word_vec_size = 16, 16, 32
    cnn_hidden_size, cnn_filter = 32, 3

    key = jax.random.PRNGKey(0)
    k_emb, k_w, k_b, k_len = jax.random.split(key, 4)

    embeddings = jax.random.normal(
        k_emb, (batch, max_len, word_vec_size), dtype=jnp.float32
    )
    positions = (jnp.arange(batch, dtype=jnp.int32) % max_len)  # unused (multi_pooling=False)
    lengths = jax.random.randint(k_len, (batch,), 1, max_len + 1).astype(jnp.int32)

    # Deterministic parameter init (Conv1d weight layout: (H, D, K)).
    weight = 0.1 * jax.random.normal(
        k_w, (cnn_hidden_size, word_vec_size, cnn_filter), dtype=jnp.float32
    )
    bias = 0.1 * jax.random.normal(k_b, (cnn_hidden_size,), dtype=jnp.float32)

    out = cnn_event_detector(
        embeddings, positions, lengths, weight, bias, cnn_filter=cnn_filter
    )
    out = jax.block_until_ready(out)

    # Reference uses the same bf16-rounded MXU operands (accumulation stays f32),
    # so the comparison is tight.
    emb_r = embeddings.astype(jnp.bfloat16).astype(jnp.float32)
    w_r = weight.astype(jnp.bfloat16).astype(jnp.float32)
    ref = _reference(emb_r, lengths, w_r, bias)

    assert out.shape == (batch, cnn_hidden_size)
    assert jnp.allclose(out, ref, atol=1e-3, rtol=1e-3), float(
        jnp.max(jnp.abs(out - ref))
    )
    print("KERNEL_OK")
</pallas_src>

<mosaic_0001>
module attributes {stable_mosaic.version = 11 : i64} {
  func.func @cnn_event_kernel(%arg0: i32, %arg1: memref<8x16x32xbf16, #tpu.memory_space<vmem>>, %arg2: memref<128x128xbf16, #tpu.memory_space<vmem>>, %arg3: memref<1x128xf32, #tpu.memory_space<vmem>>, %arg4: memref<8x128xi32, #tpu.memory_space<vmem>>, %arg5: memref<8x128xf32, #tpu.memory_space<vmem>>) attributes {dimension_semantics = [#tpu.dimension_semantics<parallel>], iteration_bounds = array<i64: 2>, scalar_prefetch = 0 : i64, scratch_operands = 0 : i64, tpu.core_type = #tpu.core_type<tc>, window_params = [{transform_indices = @transform_0, window_bounds = array<i64: 8, 16, 32>}, {pipeline_mode = #tpu.pipeline_mode<synchronous>, transform_indices = @transform_1, window_bounds = array<i64: 128, 128>}, {pipeline_mode = #tpu.pipeline_mode<synchronous>, transform_indices = @transform_2, window_bounds = array<i64: 1, 128>}, {transform_indices = @transform_3, window_bounds = array<i64: 8, 128>}, {transform_indices = @transform_4, window_bounds = array<i64: 8, 128>}]} {
    %c0 = arith.constant 0 : index
    %c0_0 = arith.constant 0 : index
    %c0_1 = arith.constant 0 : index
    %0 = vector.load %arg1[%c0, %c0_0, %c0_1] : memref<8x16x32xbf16, #tpu.memory_space<vmem>>, vector<8x16x32xbf16>
    %cst = arith.constant 0.000000e+00 : bf16
    %1 = vector.broadcast %cst : bf16 to vector<8x1x32xbf16>
    %2 = vector.extract_strided_slice %0 {offsets = [0, 0, 0], sizes = [8, 15, 32], strides = [1, 1, 1]} : vector<8x16x32xbf16> to vector<8x15x32xbf16>
    %3 = tpu.concatenate %1, %2 in 1 : vector<8x1x32xbf16>, vector<8x15x32xbf16> -> vector<8x16x32xbf16>
    %4 = vector.extract_strided_slice %0 {offsets = [0, 1, 0], sizes = [8, 15, 32], strides = [1, 1, 1]} : vector<8x16x32xbf16> to vector<8x15x32xbf16>
    %cst_2 = arith.constant 0.000000e+00 : bf16
    %5 = vector.broadcast %cst_2 : bf16 to vector<8x1x32xbf16>
    %6 = tpu.concatenate %4, %5 in 1 : vector<8x15x32xbf16>, vector<8x1x32xbf16> -> vector<8x16x32xbf16>
    %cst_3 = arith.constant 0.000000e+00 : bf16
    %7 = vector.broadcast %cst_3 : bf16 to vector<8x16x32xbf16>
    %8 = tpu.concatenate %3, %0, %6, %7 in 2 : vector<8x16x32xbf16>, vector<8x16x32xbf16>, vector<8x16x32xbf16>, vector<8x16x32xbf16> -> vector<8x16x128xbf16>
    %9 = vector.shape_cast %8 : vector<8x16x128xbf16> to vector<128x128xbf16>
    %c0_4 = arith.constant 0 : index
    %c0_5 = arith.constant 0 : index
    %10 = vector.load %arg2[%c0_4, %c0_5] : memref<128x128xbf16, #tpu.memory_space<vmem>>, vector<128x128xbf16>
    %cst_6 = arith.constant dense<0.000000e+00> : vector<128x128xf32>
    %11 = tpu.matmul %9, %10, %cst_6 {dimension_numbers = #tpu.dot_dimension_numbers<[1], [0], [0], [1], [0, 0, 1, 1], [], []>} : vector<128x128xbf16>, vector<128x128xbf16>, vector<128x128xf32> -> vector<128x128xf32>
    %c0_7 = arith.constant 0 : index
    %c0_8 = arith.constant 0 : index
    %12 = vector.load %arg3[%c0_7, %c0_8] : memref<1x128xf32, #tpu.memory_space<vmem>>, vector<1x128xf32>
    %13 = vector.broadcast %12 : vector<1x128xf32> to vector<128x128xf32>
    %14 = arith.addf %11, %13 : vector<128x128xf32>
    %cst_9 = arith.constant 0.000000e+00 : f32
    %15 = vector.broadcast %cst_9 : f32 to vector<128x128xf32>
    %16 = arith.maximumf %14, %15 : vector<128x128xf32>
    %17 = vector.shape_cast %16 : vector<128x128xf32> to vector<8x16x128xf32>
    %18 = tpu.iota {dimensions = array<i32: 1>} : vector<8x16x128xi32>
    %c0_10 = arith.constant 0 : index
    %c0_11 = arith.constant 0 : index
    %19 = vector.load %arg4[%c0_10, %c0_11] : memref<8x128xi32, #tpu.memory_space<vmem>>, vector<8x128xi32>
    %20 = vector.shape_cast %19 : vector<8x128xi32> to vector<8x1x128xi32>
    %21 = vector.broadcast %20 : vector<8x1x128xi32> to vector<8x16x128xi32>
    %22 = arith.cmpi slt, %18, %21 : vector<8x16x128xi32>
    %cst_12 = arith.constant -1.000000e+30 : f32
    %23 = vector.broadcast %cst_12 : f32 to vector<8x16x128xf32>
    %24 = arith.select %22, %17, %23 : vector<8x16x128xi1>, vector<8x16x128xf32>
    %cst_13 = arith.constant dense<0xFF800000> : vector<8x128xf32>
    %25 = vector.multi_reduction <maximumf>, %24, %cst_13 [1] : vector<8x16x128xf32> to vector<8x128xf32>
    %c0_14 = arith.constant 0 : index
    %c0_15 = arith.constant 0 : index
    %26 = vector.load %arg5[%c0_14, %c0_15] : memref<8x128xf32, #tpu.memory_space<vmem>>, vector<8x128xf32>
    tpu.vector_store %arg5[%c0_14, %c0_15], %25 {strides = array<i32>} : memref<8x128xf32, #tpu.memory_space<vmem>>, vector<8x128xf32>,
    return
  }
  func.func @transform_0(%arg0: i32) -> (i32, i32, i32) {
    %c0_i32 = arith.constant 0 : i32
    %c0_i32_0 = arith.constant 0 : i32
    %c0_i32_1 = arith.constant 0 : i32
    return %arg0, %c0_i32, %c0_i32_0 : i32, i32, i32
  }
  func.func @transform_1(%arg0: i32) -> (i32, i32) {
    %c0_i32 = arith.constant 0 : i32
    %c0_i32_0 = arith.constant 0 : i32
    %c0_i32_1 = arith.constant 0 : i32
    return %c0_i32, %c0_i32_0 : i32, i32
  }
  func.func @transform_2(%arg0: i32) -> (i32, i32) {
    %c0_i32 = arith.constant 0 : i32
    %c0_i32_0 = arith.constant 0 : i32
    %c0_i32_1 = arith.constant 0 : i32
    return %c0_i32, %c0_i32_0 : i32, i32
  }
  func.func @transform_3(%arg0: i32) -> (i32, i32) {
    %c0_i32 = arith.constant 0 : i32
    %c0_i32_0 = arith.constant 0 : i32
    return %arg0, %c0_i32 : i32, i32
  }
  func.func @transform_4(%arg0: i32) -> (i32, i32) {
    %c0_i32 = arith.constant 0 : i32
    %c0_i32_0 = arith.constant 0 : i32
    return %arg0, %c0_i32 : i32, i32
  }
}

</mosaic_0001>

<llo_original>
// kernel: tpu_custom_call.1
$region0: #{tpu_custom_call.1}
  #allocation0 [shape = 'u32[]', space=smem, size = 0x4, offset = 0x4, fixed_abs, tag = 'smem constant byte address 0x4 - core index']
  #allocation1 [shape = 'u32[72,128]{1,0:T(1,128)}', space=vmem, size = 0x9000, scoped, tag = 'internal scratch']
  %s0 = inlined_call_operand.hbm [shape: bf16[16,16,32], index: 0, kind: input, shape index: {}]
  %s1 = inlined_call_operand.hbm [shape: bf16[128,128], index: 1, kind: input, shape index: {}]
  %s2 = inlined_call_operand.vmem [shape: f32[1,128], index: 2, kind: input, shape index: {}]
  %s3 = inlined_call_operand.hbm [shape: s32[16,128], index: 3, kind: input, shape index: {}]
  %s4 = inlined_call_operand.hbm [shape: f32[16,128], index: 4, kind: output, shape index: {}]
  %s5 = sld [smem:[#allocation0]]
  $region61: #{tpu_custom_call.1} parent=0
    _
  %s7 = ssub.s32 1, %s5
  %s8 = scalar_select 0, %s7, %s5
  $region1: #{tpu_custom_call.1} parent=0
    #allocation2 [shape = 'u8[65536]{0}', space=vmem, size = 0x10000, scoped, tag = 'input window, operand 0']
    #allocation3 [shape = 's32[2]{0}', space=sflag, size = 0x8, scoped, tag = 'scoped memory for tpu_custom_call.1']
    #allocation4 [shape = 's32[2]{0}', space=sflag, size = 0x8, scoped, tag = 'scoped memory for tpu_custom_call.1']
    #allocation5 [shape = 'u8[32768]{0}', space=vmem, size = 0x8000, scoped, tag = 'input window, operand 1, single buffered']
    #allocation6 [shape = 's32[1]{0}', space=sflag, size = 0x4, scoped, tag = 'scoped memory for tpu_custom_call.1']
    #allocation7 [shape = 'u8[8192]{0}', space=vmem, size = 0x2000, scoped, tag = 'input window, operand 3']
    #allocation8 [shape = 'u8[8192]{0}', space=vmem, size = 0x2000, scoped, tag = 'output window, operand 0']
    %9 = vsyncpa [#allocation3], 0
    %s10 = scalar_lea.sflag [#allocation3], 1
    %11 = vsyncpa %s10, 0
    %12 = vsyncpa [#allocation6], 0
    %13 = vsyncpa [#allocation4], 0
    %s14 = scalar_lea.sflag [#allocation4], 1
    %15 = vsyncpa %s14, 0
    loop: start=0, step=1, limit=4
    $region2: #{tpu_custom_call.1} parent=1 // loop_pre_header
      _
    $region3: #{tpu_custom_call.1} parent=1 // loop_header
      %s17 = sphi 0, %s21
      %p18 = scmp.ge.s32.totalorder %s17, 4
      %s27 = sphi 0, %s29
      %s30 = sphi 0, %s27
      %s31 = sphi 0, %s30
      %s47 = sphi 0, %s31
      %s51 = sphi 0, %s51
      %s53 = sphi 0, %s51
      %s54 = sphi 0, %s53
      %s68 = sphi 0, %s54
      %s72 = sphi 0, %s72
      %s74 = sphi 0, %s72
      %s75 = sphi 0, %s74
      %s89 = sphi 0, %s75
      %s95 = sphi 0, %s97
      %s98 = sphi 0, %s95
      %s99 = sphi 0, %s98
      %s115 = sphi 0, %s99
      %s121 = sphi 0, %s123
      %s124 = sphi 0, %s121
      %s125 = sphi 0, %s124
      %s141 = sphi 0, %s125
    $region4: #{tpu_custom_call.1} parent=1 // loop_header_branch
      %20 = sbr.rel (%p18) target = $region8
    $region5: #{tpu_custom_call.1} parent=1 // loop_body
      %s22 = ssub.s32 %s17, 1
      %s23 = ssub.s32 %s17, 2
      %s24 = sadd.s32 %s17, 1
      %s25 = ssub.s32 %s17, %s24
      %p26 = scmp.eq.s32.totalorder %s25, 0
      %s28 = sadd.s32 %s27, 1
      %s29 = scalar_select %p26, %s27, %s28
      %p32 = pneg %p26
      %p33 = scmp.eq.s32.totalorder %s17, 1
      %p34 = por %p32, %p33
      %p35 = scmp.ne.s32.totalorder %s27, %s30
      %p36 = scmp.eq.s32.totalorder %s17, 0
      %p37 = por %p35, %p36
      %p38 = scmp.ne.s32.totalorder %s27, %s30
      %p39 = scmp.eq.s32.totalorder %s22, 1
      %p40 = por %p38, %p39
      %p41 = scmp.ne.s32.totalorder %s30, %s31
      %p42 = scmp.eq.s32.totalorder %s22, 0
      %p43 = por %p41, %p42
      %p44 = scmp.ne.s32.totalorder %s30, %s31
      %p45 = scmp.eq.s32.totalorder %s23, 1
      %p46 = por %p44, %p45
      %p48 = scmp.ne.s32.totalorder %s31, %s47
      %p49 = scmp.eq.s32.totalorder %s23, 0
      %p50 = por %p48, %p49
      %s52 = sadd.s32 %s51, 1
      %p55 = scmp.eq.s32.totalorder %s17, 1
      %p56 = scmp.ne.s32.totalorder %s51, %s53
      %p57 = scmp.eq.s32.totalorder %s17, 0
      %p58 = por %p56, %p57
      %p59 = scmp.ne.s32.totalorder %s51, %s53
      %p60 = scmp.eq.s32.totalorder %s22, 1
      %p61 = por %p59, %p60
      %p62 = scmp.ne.s32.totalorder %s53, %s54
      %p63 = scmp.eq.s32.totalorder %s22, 0
      %p64 = por %p62, %p63
      %p65 = scmp.ne.s32.totalorder %s53, %s54
      %p66 = scmp.eq.s32.totalorder %s23, 1
      %p67 = por %p65, %p66
      %p69 = scmp.ne.s32.totalorder %s54, %s68
      %p70 = scmp.eq.s32.totalorder %s23, 0
      %p71 = por %p69, %p70
      %s73 = sadd.s32 %s72, 1
      %p76 = scmp.eq.s32.totalorder %s17, 1
      %p77 = scmp.ne.s32.totalorder %s72, %s74
      %p78 = scmp.eq.s32.totalorder %s17, 0
      %p79 = por %p77, %p78
      %p80 = scmp.ne.s32.totalorder %s72, %s74
      %p81 = scmp.eq.s32.totalorder %s22, 1
      %p82 = por %p80, %p81
      %p83 = scmp.ne.s32.totalorder %s74, %s75
      %p84 = scmp.eq.s32.totalorder %s22, 0
      %p85 = por %p83, %p84
      %p86 = scmp.ne.s32.totalorder %s74, %s75
      %p87 = scmp.eq.s32.totalorder %s23, 1
      %p88 = por %p86, %p87
      %p90 = scmp.ne.s32.totalorder %s75, %s89
      %p91 = scmp.eq.s32.totalorder %s23, 0
      %p92 = por %p90, %p91
      %s93 = ssub.s32 %s17, %s24
      %p94 = scmp.eq.s32.totalorder %s93, 0
      %s96 = sadd.s32 %s95, 1
      %s97 = scalar_select %p94, %s95, %s96
      %p100 = pneg %p94
      %p101 = scmp.eq.s32.totalorder %s17, 1
      %p102 = por %p100, %p101
      %p103 = scmp.ne.s32.totalorder %s95, %s98
      %p104 = scmp.eq.s32.totalorder %s17, 0
      %p105 = por %p103, %p104
      %p106 = scmp.ne.s32.totalorder %s95, %s98
      %p107 = scmp.eq.s32.totalorder %s22, 1
      %p108 = por %p106, %p107
      %p109 = scmp.ne.s32.totalorder %s98, %s99
      %p110 = scmp.eq.s32.totalorder %s22, 0
      %p111 = por %p109, %p110
      %p112 = scmp.ne.s32.totalorder %s98, %s99
      %p113 = scmp.eq.s32.totalorder %s23, 1
      %p114 = por %p112, %p113
      %p116 = scmp.ne.s32.totalorder %s99, %s115
      %p117 = scmp.eq.s32.totalorder %s23, 0
      %p118 = por %p116, %p117
      %s119 = ssub.s32 %s17, %s24
      %p120 = scmp.eq.s32.totalorder %s119, 0
      %s122 = sadd.s32 %s121, 1
      %s123 = scalar_select %p120, %s121, %s122
      %p126 = pneg %p120
      %p127 = scmp.eq.s32.totalorder %s17, 1
      %p128 = por %p126, %p127
      %p129 = scmp.ne.s32.totalorder %s121, %s124
      %p130 = scmp.eq.s32.totalorder %s17, 0
      %p131 = por %p129, %p130
      %p132 = scmp.ne.s32.totalorder %s121, %s124
      %p133 = scmp.eq.s32.totalorder %s22, 1
      %p134 = por %p132, %p133
      %p135 = scmp.ne.s32.totalorder %s124, %s125
      %p136 = scmp.eq.s32.totalorder %s22, 0
      %p137 = por %p135, %p136
      %p138 = scmp.ne.s32.totalorder %s124, %s125
      %p139 = scmp.eq.s32.totalorder %s23, 1
      %p140 = por %p138, %p139
      %p142 = scmp.ne.s32.totalorder %s125, %s141
      %p143 = scmp.eq.s32.totalorder %s23, 0
      %p144 = por %p142, %p143
      %p145 = scmp.le.s32.totalorder 1, %s17
      %p146 = scmp.lt.s32.totalorder %s17, 3
      %p147 = pnand %p145, %p146
      %p148 = pneg %p147
      // Predicated region
      $region9: #{tpu_custom_call.1} parent=5 // pred_check
        _
      $region10: #{tpu_custom_call.1} parent=5 // pred_check_branch
        %150 = sbr.rel (%p147) target = $region12
      $region11: #{tpu_custom_call.1} parent=5 // pred_region
        %s151 = ssub.s32 %s17, 1
        // Predicated region
        $region13: #{tpu_custom_call.1} parent=11 // pred_check
          %p152 = pneg %p64
        $region14: #{tpu_custom_call.1} parent=11 // pred_check_branch
          %154 = sbr.rel (%p152) target = $region16
        $region15: #{tpu_custom_call.1} parent=11 // pred_region
          %156 = vsyncadd [#allocation6], 0
          %s157 = sshll.u32 %s1, 4
          %s158 = int_to_ptr.hbm [resolvable:$true] %s157
          %s159 = sshll.u32 [#allocation5], 4
          %s160 = int_to_ptr.vmem [resolvable:$true] %s159
          %165 = dma.hbm_to_vmem [thread:$0]  %s158, 1024, %s160, [#allocation6], 64, 64, 4
        $region16: #{tpu_custom_call.1} parent=11 // pred_fallthru
          _
        // Predicated region
        $region17: #{tpu_custom_call.1} parent=11 // pred_check
          %p166 = pneg %p85
        $region18: #{tpu_custom_call.1} parent=11 // pred_check_branch
          %168 = sbr.rel (%p166) target = $region20
        $region19: #{tpu_custom_call.1} parent=11 // pred_region
          _
        $region20: #{tpu_custom_call.1} parent=11 // pred_fallthru
          _
      $region12: #{tpu_custom_call.1} parent=5 // pred_fallthru
        _
      %p169 = scmp.lt.s32.totalorder %s17, 2
      // Predicated region
      $region21: #{tpu_custom_call.1} parent=5 // pred_check
        %p170 = pneg %p169
      $region22: #{tpu_custom_call.1} parent=5 // pred_check_branch
        %172 = sbr.rel (%p170) target = $region24
      $region23: #{tpu_custom_call.1} parent=5 // pred_region
        // Predicated region
        $region25: #{tpu_custom_call.1} parent=23 // pred_check
          %p173 = pneg %p37
        $region26: #{tpu_custom_call.1} parent=23 // pred_check_branch
          %175 = sbr.rel (%p173) target = $region28
        $region27: #{tpu_custom_call.1} parent=23 // pred_region
          %s176 = sand.u32 %s17, 1
          %s177 = scalar_lea.sflag [#allocation3], %s176
          %s178 = sand.u32 %s27, 1
          %s179 = smul.addr %s178, 64
          %s180 = scalar_lea.vmem [#allocation2], %s179
          %s181 = smul.u32 8, %s17
          %183 = vsyncadd %s177, 0
          %s184 = smul.addr %s181, 2
          %s185 = smul.addr %s184, 4
          %s186 = scalar_lea.hbm %s0, %s185
          %s187 = sshll.u32 %s186, 4
          %s188 = int_to_ptr.hbm [resolvable:$true] %s187
          %s189 = sshll.u32 %s180, 4
          %s190 = int_to_ptr.vmem [resolvable:$true] %s189
          %195 = dma.hbm_to_vmem [thread:$0]  %s188, 1024, %s190, %s177, 64, 64, 4
        $region28: #{tpu_custom_call.1} parent=23 // pred_fallthru
          _
        // Predicated region
        $region29: #{tpu_custom_call.1} parent=23 // pred_check
          %p196 = pneg %p105
        $region30: #{tpu_custom_call.1} parent=23 // pred_check_branch
          %198 = sbr.rel (%p196) target = $region32
        $region31: #{tpu_custom_call.1} parent=23 // pred_region
          %s199 = sand.u32 %s17, 1
          %s200 = scalar_lea.sflag [#allocation3], %s199
          %s201 = sand.u32 %s95, 1
          %s202 = smul.addr %s201, 8
          %s203 = scalar_lea.vmem [#allocation7], %s202
          %205 = vsyncadd %s200, 0
          %s206 = smul.addr %s17, 8
          %s207 = scalar_lea.hbm %s3, %s206
          %s209 = sshll.u32 %s207, 4
          %s210 = int_to_ptr.hbm [resolvable:$true] %s209
          %s211 = sshll.u32 %s203, 4
          %s212 = int_to_ptr.vmem [resolvable:$true] %s211
          %214 = dma.hbm_to_vmem [thread:$0]  %s210, 128, %s212, %s200
        $region32: #{tpu_custom_call.1} parent=23 // pred_fallthru
          _
      $region24: #{tpu_custom_call.1} parent=5 // pred_fallthru
        _
      %p215 = scmp.le.s32.totalorder 1, %s17
      %p216 = scmp.lt.s32.totalorder %s17, 3
      %p217 = pnand %p215, %p216
      %p218 = pneg %p217
      // Predicated region
      $region33: #{tpu_custom_call.1} parent=5 // pred_check
        _
      $region34: #{tpu_custom_call.1} parent=5 // pred_check_branch
        %220 = sbr.rel (%p217) target = $region36
      $region35: #{tpu_custom_call.1} parent=5 // pred_region
        %s221 = ssub.s32 %s17, 1
        %s222 = sand.u32 %s22, 1
        %s223 = scalar_lea.sflag [#allocation3], %s222
        %s224 = sand.u32 %s30, 1
        %s225 = smul.addr %s224, 64
        %s226 = scalar_lea.vmem [#allocation2], %s225
        // Predicated region
        $region37: #{tpu_custom_call.1} parent=35 // pred_check
          %p227 = pneg %p43
        $region38: #{tpu_custom_call.1} parent=35 // pred_check_branch
          %229 = sbr.rel (%p227) target = $region40
        $region39: #{tpu_custom_call.1} parent=35 // pred_region
          %231 = dma.done %s223, 1024
        $region40: #{tpu_custom_call.1} parent=35 // pred_fallthru
          _
        // Predicated region
        $region41: #{tpu_custom_call.1} parent=35 // pred_check
          %p232 = pneg %p64
        $region42: #{tpu_custom_call.1} parent=35 // pred_check_branch
          %234 = sbr.rel (%p232) target = $region44
        $region43: #{tpu_custom_call.1} parent=35 // pred_region
          %236 = dma.done [#allocation6], 1024
        $region44: #{tpu_custom_call.1} parent=35 // pred_fallthru
          _
        %s237 = sand.u32 %s22, 1
        %s238 = scalar_lea.sflag [#allocation3], %s237
        %s239 = sand.u32 %s98, 1
        %s240 = smul.addr %s239, 8
        %s241 = scalar_lea.vmem [#allocation7], %s240
        // Predicated region
        $region45: #{tpu_custom_call.1} parent=35 // pred_check
          %p242 = pneg %p111
        $region46: #{tpu_custom_call.1} parent=35 // pred_check_branch
          %244 = sbr.rel (%p242) target = $region48
        $region47: #{tpu_custom_call.1} parent=35 // pred_region
          %246 = dma.done %s238, 128
        $region48: #{tpu_custom_call.1} parent=35 // pred_fallthru
          _
        %s247 = sand.u32 %s22, 1
        %s248 = scalar_lea.sflag [#allocation3], %s247
        %s249 = sand.u32 %s30, 1
        %s250 = smul.addr %s249, 64
        %s251 = scalar_lea.vmem [#allocation2], %s250
        %p252 = pneg %p43
        %p253 = pneg %p40
        %p254 = pneg %p64
        %p255 = pneg %p61
        %p256 = pneg %p85
        %p257 = pneg %p82
        %s258 = sand.u32 %s22, 1
        %s259 = scalar_lea.sflag [#allocation3], %s258
        %s260 = sand.u32 %s98, 1
        %s261 = smul.addr %s260, 8
        %s262 = scalar_lea.vmem [#allocation7], %s261
        %p263 = pneg %p111
        %p264 = pneg %p108
        %p265 = pneg %p137
        %p266 = pneg %p134
        %s267 = sand.u32 %s124, 1
        %s268 = scalar_lea.sflag [#allocation4], %s267
        %s269 = sand.u32 %s124, 1
        %s270 = smul.addr %s269, 8
        %s271 = scalar_lea.vmem [#allocation8], %s270
        %s272 = smul.u32 8, %s22
        %v274 = vld [vmem:[%s226] sm:$0xf]
        %v275 = vld [vmem:[%s226 + $0x4] sm:$0xf]
        %v276 = vld [vmem:[%s226 + $0x8] sm:$0xf]
        %v277 = vld [vmem:[%s226 + $0xc] sm:$0xf]
        %v278 = vld [vmem:[%s226 + $0x10] sm:$0xf]
        %v279 = vld [vmem:[%s226 + $0x14] sm:$0xf]
        %v280 = vld [vmem:[%s226 + $0x18] sm:$0xf]
        %v281 = vld [vmem:[%s226 + $0x1c] sm:$0xf]
        %v282 = vld [vmem:[%s226 + $0x20] sm:$0xf]
        %v283 = vld [vmem:[%s226 + $0x24] sm:$0xf]
        %v284 = vld [vmem:[%s226 + $0x28] sm:$0xf]
        %v285 = vld [vmem:[%s226 + $0x2c] sm:$0xf]
        %v286 = vld [vmem:[%s226 + $0x30] sm:$0xf]
        %v287 = vld [vmem:[%s226 + $0x34] sm:$0xf]
        %v288 = vld [vmem:[%s226 + $0x38] sm:$0xf]
        %v289 = vld [vmem:[%s226 + $0x3c] sm:$0xf]
        %v306 = vunpack.c.l.b16 %v274
        %v307 = vunpack.c.l.b16 %v275
        %v308 = vunpack.c.l.b16 %v276
        %v309 = vunpack.c.l.b16 %v277
        %v310 = vunpack.c.l.b16 %v278
        %v311 = vunpack.c.l.b16 %v279
        %v312 = vunpack.c.l.b16 %v280
        %v313 = vunpack.c.l.b16 %v281
        %v314 = vunpack.c.l.b16 %v282
        %v315 = vunpack.c.l.b16 %v283
        %v316 = vunpack.c.l.b16 %v284
        %v317 = vunpack.c.l.b16 %v285
        %v318 = vunpack.c.l.b16 %v286
        %v319 = vunpack.c.l.b16 %v287
        %v320 = vunpack.c.l.b16 %v288
        %v321 = vunpack.c.l.b16 %v289
        %v322 = vpack.c.b16 %v307, %v306
        %v323 = vpack.c.b16 %v309, %v308
        %v324 = vpack.c.b16 %v311, %v310
        %v325 = vpack.c.b16 %v313, %v312
        %v326 = vpack.c.b16 %v315, %v314
        %v327 = vpack.c.b16 %v317, %v316
        %v328 = vpack.c.b16 %v319, %v318
        %v329 = vpack.c.b16 %v321, %v320
        %v331 = vshrl.u32 %v322, 16
        %v333 = vrot.slane %v331, 7
        %v334 = vshll.u32 %v322, 16
        %v336 = vor.u32 %v333, %v334
        %v338 = vshrl.u32 %v323, 16
        %v340 = vrot.slane %v338, 7
        %v341 = vshll.u32 %v323, 16
        %v343 = vor.u32 %v340, %v341
        %v345 = vshrl.u32 %v324, 16
        %v347 = vrot.slane %v345, 7
        %v348 = vshll.u32 %v324, 16
        %v350 = vor.u32 %v347, %v348
        %v352 = vshrl.u32 %v325, 16
        %v354 = vrot.slane %v352, 7
        %v355 = vshll.u32 %v325, 16
        %v357 = vor.u32 %v354, %v355
        %v359 = vshrl.u32 %v326, 16
        %v361 = vrot.slane %v359, 7
        %v362 = vshll.u32 %v326, 16
        %v364 = vor.u32 %v361, %v362
        %v366 = vshrl.u32 %v327, 16
        %v368 = vrot.slane %v366, 7
        %v369 = vshll.u32 %v327, 16
        %v371 = vor.u32 %v368, %v369
        %v373 = vshrl.u32 %v328, 16
        %v375 = vrot.slane %v373, 7
        %v376 = vshll.u32 %v328, 16
        %v378 = vor.u32 %v375, %v376
        %v380 = vshrl.u32 %v329, 16
        %v382 = vrot.slane %v380, 7
        %v383 = vshll.u32 %v329, 16
        %v385 = vor.u32 %v382, %v383
        %vm394 = vcmask 1040384
        %vm395 = vsmask.f32 256
        %vm396 = vmand %vm394, %vm395
        %v397 = vsel %vm396, 0, %v336
        %v398 = vsel %vm396, 0, %v343
        %v399 = vsel %vm396, 0, %v350
        %v400 = vsel %vm396, 0, %v357
        %v401 = vsel %vm396, 0, %v364
        %v402 = vsel %vm396, 0, %v371
        %v403 = vsel %vm396, 0, %v378
        %v404 = vsel %vm396, 0, %v385
        %v405 = vrot.slane %v334, 1
        %v406 = vor.u32 %v331, %v405
        %v407 = vrot.slane %v341, 1
        %v408 = vor.u32 %v338, %v407
        %v409 = vrot.slane %v348, 1
        %v410 = vor.u32 %v345, %v409
        %v411 = vrot.slane %v355, 1
        %v412 = vor.u32 %v352, %v411
        %v413 = vrot.slane %v362, 1
        %v414 = vor.u32 %v359, %v413
        %v415 = vrot.slane %v369, 1
        %v416 = vor.u32 %v366, %v415
        %v417 = vrot.slane %v376, 1
        %v418 = vor.u32 %v373, %v417
        %v419 = vrot.slane %v383, 1
        %v420 = vor.u32 %v380, %v419
        %vm429 = vcmask 1047552
        %vm430 = vsmask.f32 7424
        %vm431 = vmand %vm429, %vm430
        %v432 = vsel %vm431, %v406, 0
        %v433 = vsel %vm431, %v408, 0
        %v434 = vsel %vm431, %v410, 0
        %v435 = vsel %vm431, %v412, 0
        %v436 = vsel %vm431, %v414, 0
        %v437 = vsel %vm431, %v416, 0
        %v438 = vsel %vm431, %v418, 0
        %v439 = vsel %vm431, %v420, 0
        %440 = vrot.lane.b32.xlu0 %v322, 32
        %v441 = vpop.permute.xlu0 %440
        %442 = vrot.lane.b32.xlu0 %v323, 32
        %v443 = vpop.permute.xlu0 %442
        %444 = vrot.lane.b32.xlu0 %v324, 32
        %v445 = vpop.permute.xlu0 %444
        %446 = vrot.lane.b32.xlu0 %v325, 32
        %v447 = vpop.permute.xlu0 %446
        %448 = vrot.lane.b32.xlu0 %v326, 32
        %v449 = vpop.permute.xlu0 %448
        %450 = vrot.lane.b32.xlu0 %v327, 32
        %v451 = vpop.permute.xlu0 %450
        %452 = vrot.lane.b32.xlu0 %v328, 32
        %v453 = vpop.permute.xlu0 %452
        %454 = vrot.lane.b32.xlu0 %v329, 32
        %v455 = vpop.permute.xlu0 %454
        %464 = vrot.lane.b32.xlu0 %v432, 64
        %v465 = vpop.permute.xlu0 %464
        %466 = vrot.lane.b32.xlu0 %v433, 64
        %v467 = vpop.permute.xlu0 %466
        %468 = vrot.lane.b32.xlu0 %v434, 64
        %v469 = vpop.permute.xlu0 %468
        %470 = vrot.lane.b32.xlu0 %v435, 64
        %v471 = vpop.permute.xlu0 %470
        %472 = vrot.lane.b32.xlu0 %v436, 64
        %v473 = vpop.permute.xlu0 %472
        %474 = vrot.lane.b32.xlu0 %v437, 64
        %v475 = vpop.permute.xlu0 %474
        %476 = vrot.lane.b32.xlu0 %v438, 64
        %v477 = vpop.permute.xlu0 %476
        %478 = vrot.lane.b32.xlu0 %v439, 64
        %v479 = vpop.permute.xlu0 %478
        %vm480 = vcmask 261120
        %v483 = vsel %vm480, %v397, %v441
        %v486 = vsel %vm480, %v398, %v443
        %v489 = vsel %vm480, %v399, %v445
        %v492 = vsel %vm480, %v400, %v447
        %v495 = vsel %vm480, %v401, %v449
        %v498 = vsel %vm480, %v402, %v451
        %v501 = vsel %vm480, %v403, %v453
        %v504 = vsel %vm480, %v404, %v455
        %vm505 = vcmask 523264
        %v507 = vsel %vm505, %v483, %v465
        %v509 = vsel %vm505, %v486, %v467
        %v511 = vsel %vm505, %v489, %v469
        %v513 = vsel %vm505, %v492, %v471
        %v515 = vsel %vm505, %v495, %v473
        %v517 = vsel %vm505, %v498, %v475
        %v519 = vsel %vm505, %v501, %v477
        %v521 = vsel %vm505, %v504, %v479
        %vm522 = vcmask 785408
        %v524 = vsel %vm522, %v507, 0
        %v526 = vsel %vm522, %v509, 0
        %v528 = vsel %vm522, %v511, 0
        %v530 = vsel %vm522, %v513, 0
        %v532 = vsel %vm522, %v515, 0
        %v534 = vsel %vm522, %v517, 0
        %v536 = vsel %vm522, %v519, 0
        %v538 = vsel %vm522, %v521, 0
        %v540 = vld [vmem:[#allocation5] sm:$0xf]
        %v541 = vld [vmem:[#allocation5 + $0x4] sm:$0xf]
        %v542 = vld [vmem:[#allocation5 + $0x8] sm:$0xf]
        %v543 = vld [vmem:[#allocation5 + $0xc] sm:$0xf]
        %v544 = vld [vmem:[#allocation5 + $0x10] sm:$0xf]
        %v545 = vld [vmem:[#allocation5 + $0x14] sm:$0xf]
        %v546 = vld [vmem:[#allocation5 + $0x18] sm:$0xf]
        %v547 = vld [vmem:[#allocation5 + $0x1c] sm:$0xf]
        %v548 = vld [vmem:[#allocation5 + $0x20] sm:$0xf]
        %v549 = vld [vmem:[#allocation5 + $0x24] sm:$0xf]
        %v550 = vld [vmem:[#allocation5 + $0x28] sm:$0xf]
        %v551 = vld [vmem:[#allocation5 + $0x2c] sm:$0xf]
        %v552 = vld [vmem:[#allocation5 + $0x30] sm:$0xf]
        %v553 = vld [vmem:[#allocation5 + $0x34] sm:$0xf]
        %v554 = vld [vmem:[#allocation5 + $0x38] sm:$0xf]
        %v555 = vld [vmem:[#allocation5 + $0x3c] sm:$0xf]
        %v556 = vld [vmem:[%s2] sm:$0x1]
        %v558 = vperm.slane %v556, 0
        %v576 = vunpack.c.l.b16 %v540
        %v577 = vunpack.c.l.b16 %v541
        %v578 = vunpack.c.l.b16 %v542
        %v579 = vunpack.c.l.b16 %v543
        %v580 = vunpack.c.l.b16 %v544
        %v581 = vunpack.c.l.b16 %v545
        %v582 = vunpack.c.l.b16 %v546
        %v583 = vunpack.c.l.b16 %v547
        %v584 = vunpack.c.l.b16 %v548
        %v585 = vunpack.c.l.b16 %v549
        %v586 = vunpack.c.l.b16 %v550
        %v587 = vunpack.c.l.b16 %v551
        %v588 = vunpack.c.l.b16 %v552
        %v589 = vunpack.c.l.b16 %v553
        %v590 = vunpack.c.l.b16 %v554
        %v591 = vunpack.c.l.b16 %v555
        %v592 = vpack.c.b16 %v577, %v576
        %v593 = vpack.c.b16 %v579, %v578
        %v594 = vpack.c.b16 %v581, %v580
        %v595 = vpack.c.b16 %v583, %v582
        %v596 = vpack.c.b16 %v585, %v584
        %v597 = vpack.c.b16 %v587, %v586
        %v598 = vpack.c.b16 %v589, %v588
        %v599 = vpack.c.b16 %v591, %v590
        %608 = vmatpush.bf16.msra.mxu0 %v599
        %609 = vmatpush.bf16.msra.mxu0 %v598
        %610 = vmatpush.bf16.msra.mxu0 %v597
        %611 = vmatpush.bf16.msra.mxu0 %v596
        %612 = vmatpush.bf16.msra.mxu0 %v595
        %613 = vmatpush.bf16.msra.mxu0 %v594
        %614 = vmatpush.bf16.msra.mxu0 %v593
        %615 = vmatpush.bf16.msra.mxu0 %v592
        %616 = vmatmul.bf16.gmra.mxu0 %v524
        %v617 = vpop.f32.mrf.mxu0
        %v618 = vadd.f32 %v558, %v617
        %v619 = vpop.f32.mrf.mxu0
        %v620 = vadd.f32 %v558, %v619
        %621 = vmatmul.bf16.gmra.mxu0 %v526
        %v622 = vpop.f32.mrf.mxu0
        %v623 = vadd.f32 %v558, %v622
        %v624 = vpop.f32.mrf.mxu0
        %v625 = vadd.f32 %v558, %v624
        %626 = vmatmul.bf16.gmra.mxu0 %v528
        %v627 = vpop.f32.mrf.mxu0
        %v628 = vadd.f32 %v558, %v627
        %v629 = vpop.f32.mrf.mxu0
        %v630 = vadd.f32 %v558, %v629
        %631 = vmatmul.bf16.gmra.mxu0 %v530
        %v632 = vpop.f32.mrf.mxu0
        %v633 = vadd.f32 %v558, %v632
        %v634 = vpop.f32.mrf.mxu0
        %v635 = vadd.f32 %v558, %v634
        %636 = vmatmul.bf16.gmra.mxu0 %v532
        %v637 = vpop.f32.mrf.mxu0
        %v638 = vadd.f32 %v558, %v637
        %v639 = vpop.f32.mrf.mxu0
        %v640 = vadd.f32 %v558, %v639
        %641 = vmatmul.bf16.gmra.mxu0 %v534
        %v642 = vpop.f32.mrf.mxu0
        %v643 = vadd.f32 %v558, %v642
        %v644 = vpop.f32.mrf.mxu0
        %v645 = vadd.f32 %v558, %v644
        %646 = vmatmul.bf16.gmra.mxu0 %v536
        %v647 = vpop.f32.mrf.mxu0
        %v648 = vadd.f32 %v558, %v647
        %v649 = vpop.f32.mrf.mxu0
        %v650 = vadd.f32 %v558, %v649
        %651 = vmatmul.bf16.gmra.mxu0 %v538
        %v652 = vpop.f32.mrf.mxu0
        %v653 = vadd.f32 %v558, %v652
        %v654 = vpop.f32.mrf.mxu0
        %v655 = vadd.f32 %v558, %v654
        %656 = vdwg.mxu0
        %v657 = vmax.f32 %v618, 0.0
        %v658 = vmax.f32 %v620, 0.0
        %v659 = vmax.f32 %v623, 0.0
        %v660 = vmax.f32 %v625, 0.0
        %v661 = vmax.f32 %v628, 0.0
        %v662 = vmax.f32 %v630, 0.0
        %v663 = vmax.f32 %v633, 0.0
        %v664 = vmax.f32 %v635, 0.0
        %v665 = vmax.f32 %v638, 0.0
        %v666 = vmax.f32 %v640, 0.0
        %v667 = vmax.f32 %v643, 0.0
        %v668 = vmax.f32 %v645, 0.0
        %v669 = vmax.f32 %v648, 0.0
        %v670 = vmax.f32 %v650, 0.0
        %v671 = vmax.f32 %v653, 0.0
        %v672 = vmax.f32 %v655, 0.0
        %v673 = vlaneseq
        %v674 = vshrl.u32 %v673, 7
        %v675 = vadd.s32 %v674, 8
        %v676 = vld [vmem:[%s241] sm:$0xff]
        %v677 = vrot.slane %v676, 1
        %v678 = vrot.slane %v676, 2
        %v679 = vrot.slane %v676, 3
        %v680 = vrot.slane %v676, 4
        %v681 = vrot.slane %v676, 5
        %v682 = vrot.slane %v676, 6
        %v683 = vrot.slane %v676, 7
        %v684 = vperm.slane %v676, 0
        %v685 = vperm.slane %v677, 0
        %v686 = vperm.slane %v678, 0
        %v687 = vperm.slane %v679, 0
        %v688 = vperm.slane %v680, 0
        %v689 = vperm.slane %v681, 0
        %v690 = vperm.slane %v682, 0
        %v691 = vperm.slane %v683, 0
        %vm692 = vcmp.lt.s32.totalorder %v674, %v684
        %vm693 = vcmp.lt.s32.totalorder %v675, %v684
        %vm694 = vcmp.lt.s32.totalorder %v674, %v685
        %vm695 = vcmp.lt.s32.totalorder %v675, %v685
        %vm696 = vcmp.lt.s32.totalorder %v674, %v686
        %vm697 = vcmp.lt.s32.totalorder %v675, %v686
        %vm698 = vcmp.lt.s32.totalorder %v674, %v687
        %vm699 = vcmp.lt.s32.totalorder %v675, %v687
        %vm700 = vcmp.lt.s32.totalorder %v674, %v688
        %vm701 = vcmp.lt.s32.totalorder %v675, %v688
        %vm702 = vcmp.lt.s32.totalorder %v674, %v689
        %vm703 = vcmp.lt.s32.totalorder %v675, %v689
        %vm704 = vcmp.lt.s32.totalorder %v674, %v690
        %vm705 = vcmp.lt.s32.totalorder %v675, %v690
        %vm706 = vcmp.lt.s32.totalorder %v674, %v691
        %vm707 = vcmp.lt.s32.totalorder %v675, %v691
        %v708 = vsel %vm692, %v657, -1e+30
        %v709 = vsel %vm693, %v658, -1e+30
        %v710 = vsel %vm694, %v659, -1e+30
        %v711 = vsel %vm695, %v660, -1e+30
        %v712 = vsel %vm696, %v661, -1e+30
        %v713 = vsel %vm697, %v662, -1e+30
        %v714 = vsel %vm698, %v663, -1e+30
        %v715 = vsel %vm699, %v664, -1e+30
        %v716 = vsel %vm700, %v665, -1e+30
        %v717 = vsel %vm701, %v666, -1e+30
        %v718 = vsel %vm702, %v667, -1e+30
        %v719 = vsel %vm703, %v668, -1e+30
        %v720 = vsel %vm704, %v669, -1e+30
        %v721 = vsel %vm705, %v670, -1e+30
        %v722 = vsel %vm706, %v671, -1e+30
        %v723 = vsel %vm707, %v672, -1e+30
        %v724 = vmax.f32 %v708, %v709
        %v725 = vrot.slane %v724, 4
        %v726 = vmax.f32 %v724, %v725
        %v727 = vrot.slane %v726, 2
        %v728 = vmax.f32 %v726, %v727
        %v729 = vrot.slane %v728, 1
        %v730 = vmax.f32 %v728, %v729
        %v731 = vmax.f32 %v710, %v711
        %v732 = vrot.slane %v731, 4
        %v733 = vmax.f32 %v731, %v732
        %v734 = vrot.slane %v733, 2
        %v735 = vmax.f32 %v733, %v734
        %v736 = vrot.slane %v735, 1
        %v737 = vmax.f32 %v735, %v736
        %v738 = vmax.f32 %v712, %v713
        %v739 = vrot.slane %v738, 4
        %v740 = vmax.f32 %v738, %v739
        %v741 = vrot.slane %v740, 2
        %v742 = vmax.f32 %v740, %v741
        %v743 = vrot.slane %v742, 1
        %v744 = vmax.f32 %v742, %v743
        %v745 = vmax.f32 %v714, %v715
        %v746 = vrot.slane %v745, 4
        %v747 = vmax.f32 %v745, %v746
        %v748 = vrot.slane %v747, 2
        %v749 = vmax.f32 %v747, %v748
        %v750 = vrot.slane %v749, 1
        %v751 = vmax.f32 %v749, %v750
        %v752 = vmax.f32 %v716, %v717
        %v753 = vrot.slane %v752, 4
        %v754 = vmax.f32 %v752, %v753
        %v755 = vrot.slane %v754, 2
        %v756 = vmax.f32 %v754, %v755
        %v757 = vrot.slane %v756, 1
        %v758 = vmax.f32 %v756, %v757
        %v759 = vmax.f32 %v718, %v719
        %v760 = vrot.slane %v759, 4
        %v761 = vmax.f32 %v759, %v760
        %v762 = vrot.slane %v761, 2
        %v763 = vmax.f32 %v761, %v762
        %v764 = vrot.slane %v763, 1
        %v765 = vmax.f32 %v763, %v764
        %v766 = vmax.f32 %v720, %v721
        %v767 = vrot.slane %v766, 4
        %v768 = vmax.f32 %v766, %v767
        %v769 = vrot.slane %v768, 2
        %v770 = vmax.f32 %v768, %v769
        %v771 = vrot.slane %v770, 1
        %v772 = vmax.f32 %v770, %v771
        %v773 = vmax.f32 %v722, %v723
        %v774 = vrot.slane %v773, 4
        %v775 = vmax.f32 %v773, %v774
        %v776 = vrot.slane %v775, 2
        %v777 = vmax.f32 %v775, %v776
        %v778 = vrot.slane %v777, 1
        %v779 = vmax.f32 %v777, %v778
        %vm788 = vcmask 1041409
        %v789 = vsel %vm788, %v737, %v730
        %vm790 = vcmask 1042434
        %v791 = vsel %vm790, %v744, %v789
        %vm792 = vcmask 1043459
        %v793 = vsel %vm792, %v751, %v791
        %vm794 = vcmask 1044484
        %v795 = vsel %vm794, %v758, %v793
        %vm796 = vcmask 1045509
        %v797 = vsel %vm796, %v765, %v795
        %vm798 = vcmask 1046534
        %v799 = vsel %vm798, %v772, %v797
        %vm800 = vcmask 1047559
        %v801 = vsel %vm800, %v779, %v799
        %803 = vst [vmem:[%s271] sm:$0xff] %v801
        %s804 = sand.u32 %s124, 1
        %s805 = scalar_lea.sflag [#allocation4], %s804
        %s806 = sand.u32 %s124, 1
        %s807 = smul.addr %s806, 8
        %s808 = scalar_lea.vmem [#allocation8], %s807
        // Predicated region
        $region49: #{tpu_custom_call.1} parent=35 // pred_check
          %p809 = pneg %p134
        $region50: #{tpu_custom_call.1} parent=35 // pred_check_branch
          %811 = sbr.rel (%p809) target = $region52
        $region51: #{tpu_custom_call.1} parent=35 // pred_region
          %813 = vsyncadd %s805, 0
          %s814 = smul.addr %s22, 8
          %s815 = scalar_lea.hbm %s4, %s814
          %s817 = sshll.u32 %s808, 4
          %s818 = int_to_ptr.vmem [resolvable:$true] %s817
          %s819 = sshll.u32 %s815, 4
          %s820 = int_to_ptr.hbm [resolvable:$true] %s819
          %822 = dma.vmem_to_hbm [thread:$0]  %s818, 128, %s820, %s805
        $region52: #{tpu_custom_call.1} parent=35 // pred_fallthru
          _
      $region36: #{tpu_custom_call.1} parent=5 // pred_fallthru
        _
      %p823 = scmp.le.s32.totalorder 2, %s17
      // Predicated region
      $region53: #{tpu_custom_call.1} parent=5 // pred_check
        %p824 = pneg %p823
      $region54: #{tpu_custom_call.1} parent=5 // pred_check_branch
        %826 = sbr.rel (%p824) target = $region56
      $region55: #{tpu_custom_call.1} parent=5 // pred_region
        %s827 = ssub.s32 %s17, 2
        // Predicated region
        $region57: #{tpu_custom_call.1} parent=55 // pred_check
          %p828 = pneg %p140
        $region58: #{tpu_custom_call.1} parent=55 // pred_check_branch
          %830 = sbr.rel (%p828) target = $region60
        $region59: #{tpu_custom_call.1} parent=55 // pred_region
          %s831 = sand.u32 %s125, 1
          %s832 = scalar_lea.sflag [#allocation4], %s831
          %s833 = sand.u32 %s125, 1
          %s834 = smul.addr %s833, 8
          %s835 = scalar_lea.vmem [#allocation8], %s834
          %837 = dma.done %s832, 128
        $region60: #{tpu_custom_call.1} parent=55 // pred_fallthru
          _
      $region56: #{tpu_custom_call.1} parent=5 // pred_fallthru
        _
    $region6: #{tpu_custom_call.1} parent=1 // loop_footer
      %s21 = sadd.s32 1, %s17
    $region7: #{tpu_custom_call.1} parent=1 // loop_footer_branch
      %16 = sbr.rel target = $region3
    $region8: #{tpu_custom_call.1} parent=1 // loop_exit
      _
    %838 = vsyncpa [#allocation3], 1
    %s839 = scalar_lea.sflag [#allocation3], 1
    %840 = vsyncpa %s839, 1
    %841 = vsyncpa [#allocation6], 1
    %842 = vsyncpa [#allocation4], 1
    %s843 = scalar_lea.sflag [#allocation4], 1
    %844 = vsyncpa %s843, 1

</llo_original>
